<compile_context>
chip_gen: v6e
topology: v6e:2x2x1
jax: 0.10.0
libtpu: 0.0.40
codegen_flags: <defaults>
</compile_context>

<pallas_src>
import jax
import jax.numpy as jnp
import numpy as np
from jax.experimental import pallas as pl
from jax.experimental.pallas import tpu as pltpu


def _round_up(x, m):
    return ((x + m - 1) // m) * m


def _critic_kernel(obs_ref, act_ref, w1o_ref, w1a_ref, b1_ref, w2_ref, b2_ref,
                   w3t_ref, b3_ref, out_ref):
    # Layer 1: obs @ W1[:obs_dim] + acts @ W1[obs_dim:] + b1  (concat folded into 2 dots).
    # Weights may be bf16 (fast MXU path) or f32; accumulation is always f32.
    mx = w1o_ref.dtype
    h1 = (jnp.dot(obs_ref[...].astype(mx), w1o_ref[...],
                  preferred_element_type=jnp.float32)
          + jnp.dot(act_ref[...].astype(mx), w1a_ref[...],
                    preferred_element_type=jnp.float32)
          + b1_ref[...])
    h1 = jnp.where(h1 > 0, h1, 0.01 * h1)            # LeakyReLU(0.01) in f32 on the VPU

    # Layer 2: h1 @ W2 + b2, LeakyReLU(0.01)
    h2 = jnp.dot(h1.astype(w2_ref.dtype), w2_ref[...],
                 preferred_element_type=jnp.float32) + b2_ref[...]
    h2 = jnp.where(h2 > 0, h2, 0.01 * h2)

    # Head (128 -> 1): VPU multiply + lane reduction (not an N=1 MXU matmul).
    # w3t is the head weight transposed to (1, 128); b3 is a scalar living in SMEM.
    v = jnp.sum(h2 * w3t_ref[...], axis=-1, keepdims=True) + b3_ref[0]
    out_ref[...] = v.astype(out_ref.dtype)


def critic_forward(obs, acts, params, *, batch_tile=2048, use_bf16=True):
    """obs: (B, obs_dim), acts: (B, act_dim) -> (B, 1) float32."""
    w1o, w1a, b1, w2, b2, w3t, b3 = params
    obs = obs.astype(jnp.float32)
    acts = acts.astype(jnp.float32)
    if use_bf16:
        # bf16 MXU operands with f32 accumulation; also halves resident-weight DMA/VMEM.
        w1o = w1o.astype(jnp.bfloat16)
        w1a = w1a.astype(jnp.bfloat16)
        w2 = w2.astype(jnp.bfloat16)

    B, obs_dim = obs.shape
    act_dim = acts.shape[1]
    hidden = w2.shape[1]

    # Batch tile: multiple of the f32 sublane granularity (8), capped by batch_tile,
    # rounded here so any caller-provided value is safe.
    b8 = _round_up(B, 8)
    tb = max(8, min(_round_up(batch_tile, 8), b8))
    # v7x has two TensorCores: keep >= 2 "parallel" grid steps for large batches so
    # both cores get work; v5e/v6e (single TC) just see fewer, larger steps.
    if b8 >= 1024 and pl.cdiv(b8, tb) < 2:
        tb = _round_up(pl.cdiv(b8, 2), 8)
    num_tiles = pl.cdiv(B, tb)
    b_pad = num_tiles * tb
    if b_pad != B:
        obs = jnp.pad(obs, ((0, b_pad - B), (0, 0)))
        acts = jnp.pad(acts, ((0, b_pad - B), (0, 0)))

    out = pl.pallas_call(
        _critic_kernel,
        out_shape=jax.ShapeDtypeStruct((b_pad, 1), jnp.float32),
        grid=(num_tiles,),
        in_specs=[
            pl.BlockSpec((tb, obs_dim), lambda i: (i, 0)),       # obs  : tiled over batch
            pl.BlockSpec((tb, act_dim), lambda i: (i, 0)),       # acts : tiled over batch
            pl.BlockSpec((obs_dim, hidden), lambda i: (0, 0)),   # W1[:obs_dim] : resident
            pl.BlockSpec((act_dim, hidden), lambda i: (0, 0)),   # W1[obs_dim:] : resident
            pl.BlockSpec((1, hidden), lambda i: (0, 0)),         # b1   : resident
            pl.BlockSpec((hidden, hidden), lambda i: (0, 0)),    # W2   : resident
            pl.BlockSpec((1, hidden), lambda i: (0, 0)),         # b2   : resident
            pl.BlockSpec((1, hidden), lambda i: (0, 0)),         # W3^T : resident
            pl.BlockSpec(memory_space=pltpu.MemorySpace.SMEM),   # b3   : scalar in SMEM
        ],
        out_specs=pl.BlockSpec((tb, 1), lambda i: (i, 0)),
        compiler_params=pltpu.CompilerParams(
            dimension_semantics=("parallel",),
            vmem_limit_bytes=32 * 1024 * 1024,
        ),
    )(obs, acts, w1o, w1a, b1, w2, b2, w3t, b3)
    return out[:B]


def init_params(key, obs_dim, act_dim, hidden=128):
    """Parameter init mirroring the PyTorch module.

    Weights: xavier_uniform with gain = calculate_gain('leaky_relu') = sqrt(2/(1+0.01^2)).
    Biases:  PyTorch Linear default uniform(-1/sqrt(fan_in), 1/sqrt(fan_in)).
    Weights are stored as (in_features, out_features); W1 is split row-wise into its
    obs/acts halves (so the kernel never needs the concat), the head weight is kept
    transposed as (1, hidden) and the head bias as a 1-element vector (SMEM scalar).
    """
    gain = float(np.sqrt(2.0 / (1.0 + 0.01 ** 2)))
    in1 = obs_dim + act_dim
    k = jax.random.split(key, 6)

    def xavier(k_, fan_in, fan_out):
        bound = gain * float(np.sqrt(6.0 / (fan_in + fan_out)))
        return jax.random.uniform(k_, (fan_in, fan_out), jnp.float32, -bound, bound)

    def bias(k_, fan_in, fan_out):
        bound = 1.0 / float(np.sqrt(fan_in))
        return jax.random.uniform(k_, (1, fan_out), jnp.float32, -bound, bound)

    w1 = xavier(k[0], in1, hidden)       # same distribution as PyTorch's full (60,128) init
    b1 = bias(k[1], in1, hidden)
    w2 = xavier(k[2], hidden, hidden)
    b2 = bias(k[3], hidden, hidden)
    w3 = xavier(k[4], hidden, 1)         # (hidden, 1)
    b3 = bias(k[5], hidden, 1)           # (1, 1)

    w1_obs = w1[:obs_dim]                # (obs_dim, hidden)
    w1_act = w1[obs_dim:]                # (act_dim, hidden)
    w3t = w3.T                           # (1, hidden) for the VPU multiply+reduce head
    b3v = b3.reshape((1,))               # scalar bias, lives in SMEM
    return (w1_obs, w1_act, b1, w2, b2, w3t, b3v)


def critic_ref(obs, acts, params):
    """Pure-JAX f32 reference of the PyTorch forward."""
    w1o, w1a, b1, w2, b2, w3t, b3 = params
    x = jnp.concatenate([obs, acts], axis=1)
    w1 = jnp.concatenate([w1o, w1a], axis=0)
    h1 = x @ w1 + b1
    h1 = jnp.where(h1 > 0, h1, 0.01 * h1)
    h2 = h1 @ w2 + b2
    h2 = jnp.where(h2 > 0, h2, 0.01 * h2)
    return h2 @ w3t.T + b3[0]


if __name__ == "__main__":
    # Small MADDPG-style setup: n_agent=3, dim_obs=16, dim_action=4
    n_agent, dim_obs, dim_action = 3, 16, 4
    obs_dim = dim_obs * n_agent          # 48
    act_dim = dim_action * n_agent       # 12

    key = jax.random.PRNGKey(0)
    k_obs, k_act, k_par = jax.random.split(key, 3)
    params = init_params(k_par, obs_dim, act_dim)

    # Case 1: tiny batch, exact f32 MXU path (tight check vs. pure-JAX reference).
    batch = 8
    obs = jax.random.normal(k_obs, (batch, obs_dim), jnp.float32)
    acts = jax.random.normal(k_act, (batch, act_dim), jnp.float32)
    value = jax.block_until_ready(critic_forward(obs, acts, params, use_bf16=False))
    expected = critic_ref(obs, acts, params)
    np.testing.assert_allclose(np.asarray(value), np.asarray(expected),
                               rtol=1e-5, atol=1e-5)
    assert value.shape == (batch, 1)

    # Case 2: non-multiple batch with several grid steps (padding + multi-step pipeline).
    batch2 = 100
    obs2 = jax.random.normal(jax.random.PRNGKey(1), (batch2, obs_dim), jnp.float32)
    acts2 = jax.random.normal(jax.random.PRNGKey(2), (batch2, act_dim), jnp.float32)
    value2 = jax.block_until_ready(
        critic_forward(obs2, acts2, params, batch_tile=32, use_bf16=False))
    expected2 = critic_ref(obs2, acts2, params)
    np.testing.assert_allclose(np.asarray(value2), np.asarray(expected2),
                               rtol=1e-5, atol=1e-5)
    assert value2.shape == (batch2, 1)

    # Case 3: default fast path (bf16 MXU operands, f32 accumulation) on a larger batch.
    batch3 = 256
    obs3 = jax.random.normal(jax.random.PRNGKey(3), (batch3, obs_dim), jnp.float32)
    acts3 = jax.random.normal(jax.random.PRNGKey(4), (batch3, act_dim), jnp.float32)
    value3 = jax.block_until_ready(critic_forward(obs3, acts3, params))
    expected3 = critic_ref(obs3, acts3, params)
    np.testing.assert_allclose(np.asarray(value3), np.asarray(expected3),
                               rtol=5e-2, atol=1e-1)
    assert value3.shape == (batch3, 1)

    print("KERNEL_OK")
</pallas_src>

<mosaic_0001>
module attributes {stable_mosaic.version = 11 : i64} {
  func.func @_critic_kernel(%arg0: i32, %arg1: memref<8x48xf32, #tpu.memory_space<vmem>>, %arg2: memref<8x12xf32, #tpu.memory_space<vmem>>, %arg3: memref<48x128xf32, #tpu.memory_space<vmem>>, %arg4: memref<12x128xf32, #tpu.memory_space<vmem>>, %arg5: memref<1x128xf32, #tpu.memory_space<vmem>>, %arg6: memref<128x128xf32, #tpu.memory_space<vmem>>, %arg7: memref<1x128xf32, #tpu.memory_space<vmem>>, %arg8: memref<1x128xf32, #tpu.memory_space<vmem>>, %arg9: memref<1xf32, #tpu.memory_space<smem>>, %arg10: memref<8x1xf32, #tpu.memory_space<vmem>>) attributes {dimension_semantics = [#tpu.dimension_semantics<parallel>], iteration_bounds = array<i64: 1>, scalar_prefetch = 0 : i64, scratch_operands = 0 : i64, tpu.core_type = #tpu.core_type<tc>, window_params = [{transform_indices = @transform_0, window_bounds = array<i64: 8, 48>}, {transform_indices = @transform_1, window_bounds = array<i64: 8, 12>}, {pipeline_mode = #tpu.pipeline_mode<synchronous>, transform_indices = @transform_2, window_bounds = array<i64: 48, 128>}, {pipeline_mode = #tpu.pipeline_mode<synchronous>, transform_indices = @transform_3, window_bounds = array<i64: 12, 128>}, {pipeline_mode = #tpu.pipeline_mode<synchronous>, transform_indices = @transform_4, window_bounds = array<i64: 1, 128>}, {pipeline_mode = #tpu.pipeline_mode<synchronous>, transform_indices = @transform_5, window_bounds = array<i64: 128, 128>}, {pipeline_mode = #tpu.pipeline_mode<synchronous>, transform_indices = @transform_6, window_bounds = array<i64: 1, 128>}, {pipeline_mode = #tpu.pipeline_mode<synchronous>, transform_indices = @transform_7, window_bounds = array<i64: 1, 128>}, {transform_indices = @transform_8, window_bounds = array<i64: 1>}, {transform_indices = @transform_9, window_bounds = array<i64: 8, 1>}]} {
    %c0 = arith.constant 0 : index
    %c0_0 = arith.constant 0 : index
    %0 = vector.load %arg1[%c0, %c0_0] : memref<8x48xf32, #tpu.memory_space<vmem>>, vector<8x48xf32>
    %c0_1 = arith.constant 0 : index
    %c0_2 = arith.constant 0 : index
    %1 = vector.load %arg3[%c0_1, %c0_2] : memref<48x128xf32, #tpu.memory_space<vmem>>, vector<48x128xf32>
    %cst = arith.constant dense<0.000000e+00> : vector<8x128xf32>
    %2 = tpu.matmul %0, %1, %cst {dimension_numbers = #tpu.dot_dimension_numbers<[1], [0], [0], [1], [0, 0, 1, 1], [], []>} : vector<8x48xf32>, vector<48x128xf32>, vector<8x128xf32> -> vector<8x128xf32>
    %c0_3 = arith.constant 0 : index
    %c0_4 = arith.constant 0 : index
    %3 = vector.load %arg2[%c0_3, %c0_4] : memref<8x12xf32, #tpu.memory_space<vmem>>, vector<8x12xf32>
    %c0_5 = arith.constant 0 : index
    %c0_6 = arith.constant 0 : index
    %4 = vector.load %arg4[%c0_5, %c0_6] : memref<12x128xf32, #tpu.memory_space<vmem>>, vector<12x128xf32>
    %cst_7 = arith.constant dense<0.000000e+00> : vector<8x128xf32>
    %5 = tpu.matmul %3, %4, %cst_7 {dimension_numbers = #tpu.dot_dimension_numbers<[1], [0], [0], [1], [0, 0, 1, 1], [], []>} : vector<8x12xf32>, vector<12x128xf32>, vector<8x128xf32> -> vector<8x128xf32>
    %6 = arith.addf %2, %5 : vector<8x128xf32>
    %c0_8 = arith.constant 0 : index
    %c0_9 = arith.constant 0 : index
    %7 = vector.load %arg5[%c0_8, %c0_9] : memref<1x128xf32, #tpu.memory_space<vmem>>, vector<1x128xf32>
    %8 = vector.broadcast %7 : vector<1x128xf32> to vector<8x128xf32>
    %9 = arith.addf %6, %8 : vector<8x128xf32>
    %cst_10 = arith.constant 0.000000e+00 : f32
    %10 = vector.broadcast %cst_10 : f32 to vector<8x128xf32>
    %11 = arith.cmpf ogt, %9, %10 : vector<8x128xf32>
    %cst_11 = arith.constant 0.00999999977 : f32
    %12 = vector.broadcast %cst_11 : f32 to vector<8x128xf32>
    %13 = arith.mulf %12, %9 : vector<8x128xf32>
    %14 = arith.select %11, %9, %13 : vector<8x128xi1>, vector<8x128xf32>
    %c0_12 = arith.constant 0 : index
    %c0_13 = arith.constant 0 : index
    %15 = vector.load %arg6[%c0_12, %c0_13] : memref<128x128xf32, #tpu.memory_space<vmem>>, vector<128x128xf32>
    %cst_14 = arith.constant dense<0.000000e+00> : vector<8x128xf32>
    %16 = tpu.matmul %14, %15, %cst_14 {dimension_numbers = #tpu.dot_dimension_numbers<[1], [0], [0], [1], [0, 0, 1, 1], [], []>} : vector<8x128xf32>, vector<128x128xf32>, vector<8x128xf32> -> vector<8x128xf32>
    %c0_15 = arith.constant 0 : index
    %c0_16 = arith.constant 0 : index
    %17 = vector.load %arg7[%c0_15, %c0_16] : memref<1x128xf32, #tpu.memory_space<vmem>>, vector<1x128xf32>
    %18 = vector.broadcast %17 : vector<1x128xf32> to vector<8x128xf32>
    %19 = arith.addf %16, %18 : vector<8x128xf32>
    %cst_17 = arith.constant 0.000000e+00 : f32
    %20 = vector.broadcast %cst_17 : f32 to vector<8x128xf32>
    %21 = arith.cmpf ogt, %19, %20 : vector<8x128xf32>
    %cst_18 = arith.constant 0.00999999977 : f32
    %22 = vector.broadcast %cst_18 : f32 to vector<8x128xf32>
    %23 = arith.mulf %22, %19 : vector<8x128xf32>
    %24 = arith.select %21, %19, %23 : vector<8x128xi1>, vector<8x128xf32>
    %c0_19 = arith.constant 0 : index
    %c0_20 = arith.constant 0 : index
    %25 = vector.load %arg8[%c0_19, %c0_20] : memref<1x128xf32, #tpu.memory_space<vmem>>, vector<1x128xf32>
    %26 = vector.broadcast %25 : vector<1x128xf32> to vector<8x128xf32>
    %27 = arith.mulf %24, %26 : vector<8x128xf32>
    %cst_21 = arith.constant dense<0.000000e+00> : vector<8xf32>
    %28 = vector.multi_reduction <add>, %27, %cst_21 [1] : vector<8x128xf32> to vector<8xf32>
    %29 = vector.shape_cast %28 : vector<8xf32> to vector<8x1xf32>
    %c0_22 = arith.constant 0 : index
    %30 = memref.load %arg9[%c0_22] : memref<1xf32, #tpu.memory_space<smem>>
    %31 = vector.broadcast %30 : f32 to vector<8x1xf32>
    %32 = arith.addf %29, %31 : vector<8x1xf32>
    %c0_23 = arith.constant 0 : index
    %c0_24 = arith.constant 0 : index
    %33 = vector.load %arg10[%c0_23, %c0_24] : memref<8x1xf32, #tpu.memory_space<vmem>>, vector<8x1xf32>
    tpu.vector_store %arg10[%c0_23, %c0_24], %32 {strides = array<i32>} : memref<8x1xf32, #tpu.memory_space<vmem>>, vector<8x1xf32>,
    return
  }
  func.func @transform_0(%arg0: i32) -> (i32, i32) {
    %c0_i32 = arith.constant 0 : i32
    %c0_i32_0 = arith.constant 0 : i32
    return %arg0, %c0_i32 : i32, i32
  }
  func.func @transform_1(%arg0: i32) -> (i32, i32) {
    %c0_i32 = arith.constant 0 : i32
    %c0_i32_0 = arith.constant 0 : i32
    return %arg0, %c0_i32 : i32, i32
  }
  func.func @transform_2(%arg0: i32) -> (i32, i32) {
    %c0_i32 = arith.constant 0 : i32
    %c0_i32_0 = arith.constant 0 : i32
    %c0_i32_1 = arith.constant 0 : i32
    return %c0_i32, %c0_i32_0 : i32, i32
  }
  func.func @transform_3(%arg0: i32) -> (i32, i32) {
    %c0_i32 = arith.constant 0 : i32
    %c0_i32_0 = arith.constant 0 : i32
    %c0_i32_1 = arith.constant 0 : i32
    return %c0_i32, %c0_i32_0 : i32, i32
  }
  func.func @transform_4(%arg0: i32) -> (i32, i32) {
    %c0_i32 = arith.constant 0 : i32
    %c0_i32_0 = arith.constant 0 : i32
    %c0_i32_1 = arith.constant 0 : i32
    return %c0_i32, %c0_i32_0 : i32, i32
  }
  func.func @transform_5(%arg0: i32) -> (i32, i32) {
    %c0_i32 = arith.constant 0 : i32
    %c0_i32_0 = arith.constant 0 : i32
    %c0_i32_1 = arith.constant 0 : i32
    return %c0_i32, %c0_i32_0 : i32, i32
  }
  func.func @transform_6(%arg0: i32) -> (i32, i32) {
    %c0_i32 = arith.constant 0 : i32
    %c0_i32_0 = arith.constant 0 : i32
    %c0_i32_1 = arith.constant 0 : i32
    return %c0_i32, %c0_i32_0 : i32, i32
  }
  func.func @transform_7(%arg0: i32) -> (i32, i32) {
    %c0_i32 = arith.constant 0 : i32
    %c0_i32_0 = arith.constant 0 : i32
    %c0_i32_1 = arith.constant 0 : i32
    return %c0_i32, %c0_i32_0 : i32, i32
  }
  func.func @transform_8(%arg0: i32) -> i32 {
    %c0_i32 = arith.constant 0 : i32
    %c0_i32_0 = arith.constant 0 : i32
    return %c0_i32 : i32
  }
  func.func @transform_9(%arg0: i32) -> (i32, i32) {
    %c0_i32 = arith.constant 0 : i32
    %c0_i32_0 = arith.constant 0 : i32
    return %arg0, %c0_i32 : i32, i32
  }
}

</mosaic_0001>

<llo_original>
// kernel: tpu_custom_call.1
$region0: #{tpu_custom_call.1}
  #allocation0 [shape = 'u32[]', space=smem, size = 0x4, offset = 0x4, fixed_abs, tag = 'smem constant byte address 0x4 - core index']
  #allocation1 [shape = 'u32[144,128]{1,0:T(1,128)}', space=vmem, size = 0x12000, scoped, tag = 'internal scratch']
  #allocation2 [shape = 'f32[1]{0:T(128)S(6)}', space=smem, size = 0x200, scoped, tag = 'scoped memory for tpu_custom_call.1']
  %s0 = inlined_call_operand.hbm [shape: f32[8,48], index: 0, kind: input, shape index: {}]
  %s1 = inlined_call_operand.hbm [shape: f32[8,12], index: 1, kind: input, shape index: {}]
  %s2 = inlined_call_operand.hbm [shape: f32[48,128], index: 2, kind: input, shape index: {}]
  %s3 = inlined_call_operand.hbm [shape: f32[12,128], index: 3, kind: input, shape index: {}]
  %s4 = inlined_call_operand.vmem [shape: f32[1,128], index: 4, kind: input, shape index: {}]
  %s5 = inlined_call_operand.hbm [shape: f32[128,128], index: 5, kind: input, shape index: {}]
  %s6 = inlined_call_operand.vmem [shape: f32[1,128], index: 6, kind: input, shape index: {}]
  %s7 = inlined_call_operand.vmem [shape: f32[1,128], index: 7, kind: input, shape index: {}]
  %s8 = inlined_call_operand.<no memory space> [shape: f32[1], index: 8, kind: input, shape index: {}]
  %s9 = inlined_call_operand.vmem [shape: f32[8,1], index: 9, kind: output, shape index: {}]
  %s10 = sld [smem:[#allocation0]]
  $region66: #{tpu_custom_call.1} parent=0
    _
  %s12 = ssub.s32 1, %s10
  %s13 = scalar_select 0, %s12, %s10
  %14 = sst [smem:[#allocation2]] %s8
  $region1: #{tpu_custom_call.1} parent=0
    #allocation3 [shape = 'u8[4096]{0}', space=vmem, size = 0x1000, scoped, tag = 'input window, operand 0, single buffered']
    #allocation4 [shape = 's32[1]{0}', space=sflag, size = 0x4, scoped, tag = 'scoped memory for tpu_custom_call.1']
    #allocation5 [shape = 'u8[4096]{0}', space=vmem, size = 0x1000, scoped, tag = 'input window, operand 1, single buffered']
    #allocation6 [shape = 's32[1]{0}', space=sflag, size = 0x4, scoped, tag = 'scoped memory for tpu_custom_call.1']
    #allocation7 [shape = 'u8[24576]{0}', space=vmem, size = 0x6000, scoped, tag = 'input window, operand 2, single buffered']
    #allocation8 [shape = 'u8[8192]{0}', space=vmem, size = 0x2000, scoped, tag = 'input window, operand 3, single buffered']
    #allocation9 [shape = 's32[1]{0}', space=sflag, size = 0x4, scoped, tag = 'scoped memory for tpu_custom_call.1']
    #allocation10 [shape = 'u8[65536]{0}', space=vmem, size = 0x10000, scoped, tag = 'input window, operand 5, single buffered']
    %15 = vsyncpa [#allocation4], 0
    %16 = vsyncpa [#allocation6], 0
    %17 = vsyncpa [#allocation9], 0
    // Predicated region
    $region2: #{tpu_custom_call.1} parent=1 // pred_check
      _
    $region3: #{tpu_custom_call.1} parent=1 // pred_check_branch
      %19 = sbr.rel (0) target = $region5
    $region4: #{tpu_custom_call.1} parent=1 // pred_region
      %s21 = ssub.s32 128, 128
      %22 = vsyncadd [#allocation4], %s21
      %s24 = sshll.u32 [#allocation3], 4
      %s25 = int_to_ptr.vmem [resolvable:$true] %s24
      %27 = dma.hbm_to_vmem [thread:$0]  %s0, 128, %s25, [#allocation4]
    $region5: #{tpu_custom_call.1} parent=1 // pred_fallthru
      _
    // Predicated region
    $region6: #{tpu_custom_call.1} parent=1 // pred_check
      _
    $region7: #{tpu_custom_call.1} parent=1 // pred_check_branch
      %29 = sbr.rel (0) target = $region9
    $region8: #{tpu_custom_call.1} parent=1 // pred_region
      %s31 = ssub.s32 128, 128
      %32 = vsyncadd [#allocation6], %s31
      %s34 = sshll.u32 [#allocation5], 4
      %s35 = int_to_ptr.vmem [resolvable:$true] %s34
      %37 = dma.hbm_to_vmem [thread:$0]  %s1, 128, %s35, [#allocation6]
    $region9: #{tpu_custom_call.1} parent=1 // pred_fallthru
      _
    // Predicated region
    $region10: #{tpu_custom_call.1} parent=1 // pred_check
      _
    $region11: #{tpu_custom_call.1} parent=1 // pred_check_branch
      %39 = sbr.rel (0) target = $region13
    $region12: #{tpu_custom_call.1} parent=1 // pred_region
      %s41 = ssub.s32 768, 768
      %42 = vsyncadd [#allocation6], %s41
      %s43 = sshll.u32 [#allocation7], 4
      %s44 = int_to_ptr.vmem [resolvable:$true] %s43
      %49 = dma.hbm_to_vmem [thread:$0]  %s2, 768, %s44, [#allocation6], 128, 128, 8
    $region13: #{tpu_custom_call.1} parent=1 // pred_fallthru
      _
    // Predicated region
    $region14: #{tpu_custom_call.1} parent=1 // pred_check
      _
    $region15: #{tpu_custom_call.1} parent=1 // pred_check_branch
      %51 = sbr.rel (0) target = $region17
    $region16: #{tpu_custom_call.1} parent=1 // pred_region
      %s53 = ssub.s32 256, 256
      %54 = vsyncadd [#allocation9], %s53
      %s55 = sshll.u32 [#allocation8], 4
      %s56 = int_to_ptr.vmem [resolvable:$true] %s55
      %61 = dma.hbm_to_vmem [thread:$0]  %s3, 256, %s56, [#allocation9], 128, 128, 8
    $region17: #{tpu_custom_call.1} parent=1 // pred_fallthru
      _
    // Predicated region
    $region18: #{tpu_custom_call.1} parent=1 // pred_check
      _
    $region19: #{tpu_custom_call.1} parent=1 // pred_check_branch
      %63 = sbr.rel (0) target = $region21
    $region20: #{tpu_custom_call.1} parent=1 // pred_region
      _
    $region21: #{tpu_custom_call.1} parent=1 // pred_fallthru
      _
    // Predicated region
    $region22: #{tpu_custom_call.1} parent=1 // pred_check
      _
    $region23: #{tpu_custom_call.1} parent=1 // pred_check_branch
      %65 = sbr.rel (0) target = $region25
    $region24: #{tpu_custom_call.1} parent=1 // pred_region
      %s67 = ssub.s32 2048, 2048
      %68 = vsyncadd [#allocation9], %s67
      %s69 = sshll.u32 [#allocation10], 4
      %s70 = int_to_ptr.vmem [resolvable:$true] %s69
      %75 = dma.hbm_to_vmem [thread:$0]  %s5, 2048, %s70, [#allocation9], 128, 128, 8
    $region25: #{tpu_custom_call.1} parent=1 // pred_fallthru
      _
    // Predicated region
    $region26: #{tpu_custom_call.1} parent=1 // pred_check
      _
    $region27: #{tpu_custom_call.1} parent=1 // pred_check_branch
      %77 = sbr.rel (0) target = $region29
    $region28: #{tpu_custom_call.1} parent=1 // pred_region
      _
    $region29: #{tpu_custom_call.1} parent=1 // pred_fallthru
      _
    // Predicated region
    $region30: #{tpu_custom_call.1} parent=1 // pred_check
      _
    $region31: #{tpu_custom_call.1} parent=1 // pred_check_branch
      %79 = sbr.rel (0) target = $region33
    $region32: #{tpu_custom_call.1} parent=1 // pred_region
      _
    $region33: #{tpu_custom_call.1} parent=1 // pred_fallthru
      _
    // Predicated region
    $region34: #{tpu_custom_call.1} parent=1 // pred_check
      _
    $region35: #{tpu_custom_call.1} parent=1 // pred_check_branch
      %81 = sbr.rel (0) target = $region37
    $region36: #{tpu_custom_call.1} parent=1 // pred_region
      _
    $region37: #{tpu_custom_call.1} parent=1 // pred_fallthru
      _
    // Predicated region
    $region38: #{tpu_custom_call.1} parent=1 // pred_check
      _
    $region39: #{tpu_custom_call.1} parent=1 // pred_check_branch
      %83 = sbr.rel (0) target = $region41
    $region40: #{tpu_custom_call.1} parent=1 // pred_region
      %84 = dma.done [#allocation4], 128
    $region41: #{tpu_custom_call.1} parent=1 // pred_fallthru
      _
    // Predicated region
    $region42: #{tpu_custom_call.1} parent=1 // pred_check
      _
    $region43: #{tpu_custom_call.1} parent=1 // pred_check_branch
      %86 = sbr.rel (0) target = $region45
    $region44: #{tpu_custom_call.1} parent=1 // pred_region
      %87 = dma.done [#allocation6], 128
    $region45: #{tpu_custom_call.1} parent=1 // pred_fallthru
      _
    // Predicated region
    $region46: #{tpu_custom_call.1} parent=1 // pred_check
      _
    $region47: #{tpu_custom_call.1} parent=1 // pred_check_branch
      %89 = sbr.rel (0) target = $region49
    $region48: #{tpu_custom_call.1} parent=1 // pred_region
      %90 = dma.done [#allocation6], 768
    $region49: #{tpu_custom_call.1} parent=1 // pred_fallthru
      _
    // Predicated region
    $region50: #{tpu_custom_call.1} parent=1 // pred_check
      _
    $region51: #{tpu_custom_call.1} parent=1 // pred_check_branch
      %92 = sbr.rel (0) target = $region53
    $region52: #{tpu_custom_call.1} parent=1 // pred_region
      %93 = dma.done [#allocation9], 256
    $region53: #{tpu_custom_call.1} parent=1 // pred_fallthru
      _
    // Predicated region
    $region54: #{tpu_custom_call.1} parent=1 // pred_check
      _
    $region55: #{tpu_custom_call.1} parent=1 // pred_check_branch
      %95 = sbr.rel (0) target = $region57
    $region56: #{tpu_custom_call.1} parent=1 // pred_region
      %96 = dma.done [#allocation9], 2048
    $region57: #{tpu_custom_call.1} parent=1 // pred_fallthru
      _
    %v97 = vld [vmem:[#allocation3] sm:$0xff]
    %v98 = vld [vmem:[#allocation7] sm:$0xff]
    %v99 = vld [vmem:[#allocation7 + $0x8] sm:$0xff]
    %v100 = vld [vmem:[#allocation7 + $0x10] sm:$0xff]
    %v101 = vld [vmem:[#allocation7 + $0x18] sm:$0xff]
    %v102 = vld [vmem:[#allocation7 + $0x20] sm:$0xff]
    %v103 = vld [vmem:[#allocation7 + $0x28] sm:$0xff]
    %v104 = vld [vmem:[#allocation5] sm:$0xff]
    %v105 = vld [vmem:[#allocation8] sm:$0xff]
    %v106 = vld [vmem:[#allocation8 + $0x8] sm:$0xf]
    %vm107 = vcmask 97280
    %v109 = vsel %vm107, %v104, 0
    %vm111 = vcmask 1043456
    %v113 = vsel %vm111, %v106, 0
    %115 = vmatprep.subr.mxu0 0.0
    %116 = vmatpush1.msra.mxu0 0.0
    %117 = vmatprep.subr.mxu0 0.0
    %118 = vmatpush1.msra.mxu0 0.0
    %119 = vmatprep.subr.mxu0 0.0
    %120 = vmatpush1.msra.mxu0 0.0
    %121 = vmatprep.subr.mxu0 0.0
    %122 = vmatpush1.msra.mxu0 0.0
    %123 = vmatprep.subr.mxu0 0.0
    %124 = vmatpush1.msra.mxu0 0.0
    %125 = vmatprep.subr.mxu0 0.0
    %126 = vmatpush1.msra.mxu0 0.0
    %127 = vmatprep.subr.mxu0 0.0
    %128 = vmatpush1.msra.mxu0 0.0
    %129 = vmatprep.subr.mxu0 0.0
    %130 = vmatpush1.msra.mxu0 0.0
    %131 = vmatprep.subr.mxu0 0.0
    %132 = vmatpush1.msra.mxu0 0.0
    %133 = vmatprep.subr.mxu0 0.0
    %134 = vmatpush1.msra.mxu0 0.0
    %135 = vmatprep.subr.mxu0 0.0
    %136 = vmatpush1.msra.mxu0 0.0
    %137 = vmatprep.subr.mxu0 0.0
    %138 = vmatpush1.msra.mxu0 0.0
    %139 = vmatprep.subr.mxu0 0.0
    %140 = vmatpush1.msra.mxu0 0.0
    %141 = vmatprep.subr.mxu0 0.0
    %142 = vmatpush1.msra.mxu0 0.0
    %143 = vmatprep.subr.mxu0 0.0
    %144 = vmatpush1.msra.mxu0 %v113
    %145 = vmatprep.subr.mxu0 0.0
    %146 = vmatpush1.msra.mxu0 %v105
    %147 = vmatprep.subr.mxu0 0.0
    %148 = vmatpush2.msra.mxu0 0.0
    %149 = vmatprep.subr.mxu0 0.0
    %150 = vmatpush2.msra.mxu0 0.0
    %151 = vmatprep.subr.mxu0 0.0
    %152 = vmatpush2.msra.mxu0 0.0
    %153 = vmatprep.subr.mxu0 0.0
    %154 = vmatpush2.msra.mxu0 0.0
    %155 = vmatprep.subr.mxu0 0.0
    %156 = vmatpush2.msra.mxu0 0.0
    %157 = vmatprep.subr.mxu0 0.0
    %158 = vmatpush2.msra.mxu0 0.0
    %159 = vmatprep.subr.mxu0 0.0
    %160 = vmatpush2.msra.mxu0 0.0
    %161 = vmatprep.subr.mxu0 0.0
    %162 = vmatpush2.msra.mxu0 0.0
    %163 = vmatprep.subr.mxu0 0.0
    %164 = vmatpush2.msra.mxu0 0.0
    %165 = vmatprep.subr.mxu0 0.0
    %166 = vmatpush2.msra.mxu0 0.0
    %167 = vmatprep.subr.mxu0 0.0
    %168 = vmatpush2.msra.mxu0 0.0
    %169 = vmatprep.subr.mxu0 0.0
    %170 = vmatpush2.msra.mxu0 0.0
    %171 = vmatprep.subr.mxu0 0.0
    %172 = vmatpush2.msra.mxu0 0.0
    %173 = vmatprep.subr.mxu0 0.0
    %174 = vmatpush2.msra.mxu0 0.0
    %175 = vmatprep.subr.mxu0 0.0
    %176 = vmatpush2.msra.mxu0 0.0
    %177 = vmatprep.subr.mxu0 0.0
    %178 = vmatpush2.msra.mxu0 0.0
    %179 = vmatprep.mubr.f32.mxu0 0.0
    %180 = vmatmul.mubr.f32.gmra.mxu0 %v109
    %v181 = vpop.f32.mrf.mxu0
    %v182 = vadd.f32 0.0, %v181
    %v183 = vpop.f32.mrf.mxu0
    %184 = vdwg.mxu0
    %vm185 = vcmask 392192
    %v187 = vsel %vm185, %v97, 0
    %189 = vmatprep.subr.mxu0 0.0
    %190 = vmatpush1.msra.mxu0 0.0
    %191 = vmatprep.subr.mxu0 0.0
    %192 = vmatpush1.msra.mxu0 0.0
    %193 = vmatprep.subr.mxu0 0.0
    %194 = vmatpush1.msra.mxu0 0.0
    %195 = vmatprep.subr.mxu0 0.0
    %196 = vmatpush1.msra.mxu0 0.0
    %197 = vmatprep.subr.mxu0 0.0
    %198 = vmatpush1.msra.mxu0 0.0
    %199 = vmatprep.subr.mxu0 0.0
    %200 = vmatpush1.msra.mxu0 0.0
    %201 = vmatprep.subr.mxu0 0.0
    %202 = vmatpush1.msra.mxu0 0.0
    %203 = vmatprep.subr.mxu0 0.0
    %204 = vmatpush1.msra.mxu0 0.0
    %205 = vmatprep.subr.mxu0 0.0
    %206 = vmatpush1.msra.mxu0 0.0
    %207 = vmatprep.subr.mxu0 0.0
    %208 = vmatpush1.msra.mxu0 0.0
    %209 = vmatprep.subr.mxu0 0.0
    %210 = vmatpush1.msra.mxu0 %v103
    %211 = vmatprep.subr.mxu0 0.0
    %212 = vmatpush1.msra.mxu0 %v102
    %213 = vmatprep.subr.mxu0 0.0
    %214 = vmatpush1.msra.mxu0 %v101
    %215 = vmatprep.subr.mxu0 0.0
    %216 = vmatpush1.msra.mxu0 %v100
    %217 = vmatprep.subr.mxu0 0.0
    %218 = vmatpush1.msra.mxu0 %v99
    %219 = vmatprep.subr.mxu0 0.0
    %220 = vmatpush1.msra.mxu0 %v98
    %221 = vmatprep.subr.mxu0 0.0
    %222 = vmatpush2.msra.mxu0 0.0
    %223 = vmatprep.subr.mxu0 0.0
    %224 = vmatpush2.msra.mxu0 0.0
    %225 = vmatprep.subr.mxu0 0.0
    %226 = vmatpush2.msra.mxu0 0.0
    %227 = vmatprep.subr.mxu0 0.0
    %228 = vmatpush2.msra.mxu0 0.0
    %229 = vmatprep.subr.mxu0 0.0
    %230 = vmatpush2.msra.mxu0 0.0
    %231 = vmatprep.subr.mxu0 0.0
    %232 = vmatpush2.msra.mxu0 0.0
    %233 = vmatprep.subr.mxu0 0.0
    %234 = vmatpush2.msra.mxu0 0.0
    %235 = vmatprep.subr.mxu0 0.0
    %236 = vmatpush2.msra.mxu0 0.0
    %237 = vmatprep.subr.mxu0 0.0
    %238 = vmatpush2.msra.mxu0 0.0
    %239 = vmatprep.subr.mxu0 0.0
    %240 = vmatpush2.msra.mxu0 0.0
    %241 = vmatprep.subr.mxu0 0.0
    %242 = vmatpush2.msra.mxu0 0.0
    %243 = vmatprep.subr.mxu0 0.0
    %244 = vmatpush2.msra.mxu0 0.0
    %245 = vmatprep.subr.mxu0 0.0
    %246 = vmatpush2.msra.mxu0 0.0
    %247 = vmatprep.subr.mxu0 0.0
    %248 = vmatpush2.msra.mxu0 0.0
    %249 = vmatprep.subr.mxu0 0.0
    %250 = vmatpush2.msra.mxu0 0.0
    %251 = vmatprep.subr.mxu0 0.0
    %252 = vmatpush2.msra.mxu0 0.0
    %253 = vmatprep.mubr.f32.mxu0 0.0
    %254 = vmatmul.mubr.f32.gmra.mxu0 %v187
    %v255 = vpop.f32.mrf.mxu0
    %v256 = vadd.f32 %v182, %v255
    %v257 = vpop.f32.mrf.mxu0
    %258 = vdwg.mxu0
    %v259 = vld [vmem:[%s4] sm:$0x1]
    %v261 = vlaneseq
    %v262 = vshrl.u32 %v261, 7
    %v263 = vsub.s32 0, %v262
    %v264 = vrot.slane %v259, %v263
    %v266 = vadd.f32 %v256, %v264
    %vm267 = vcmp.gt.f32.partialorder %v266, 0.0
    %v268 = vmul.f32 %v266, 0.01
    %v269 = vsel %vm267, %v266, %v268
    %v270 = vld [vmem:[#allocation10] sm:$0xff]
    %v271 = vld [vmem:[#allocation10 + $0x8] sm:$0xff]
    %v272 = vld [vmem:[#allocation10 + $0x10] sm:$0xff]
    %v273 = vld [vmem:[#allocation10 + $0x18] sm:$0xff]
    %v274 = vld [vmem:[#allocation10 + $0x20] sm:$0xff]
    %v275 = vld [vmem:[#allocation10 + $0x28] sm:$0xff]
    %v276 = vld [vmem:[#allocation10 + $0x30] sm:$0xff]
    %v277 = vld [vmem:[#allocation10 + $0x38] sm:$0xff]
    %v278 = vld [vmem:[#allocation10 + $0x40] sm:$0xff]
    %v279 = vld [vmem:[#allocation10 + $0x48] sm:$0xff]
    %v280 = vld [vmem:[#allocation10 + $0x50] sm:$0xff]
    %v281 = vld [vmem:[#allocation10 + $0x58] sm:$0xff]
    %v282 = vld [vmem:[#allocation10 + $0x60] sm:$0xff]
    %v283 = vld [vmem:[#allocation10 + $0x68] sm:$0xff]
    %v284 = vld [vmem:[#allocation10 + $0x70] sm:$0xff]
    %v285 = vld [vmem:[#allocation10 + $0x78] sm:$0xff]
    %v286 = vld [vmem:[%s6] sm:$0x1]
    %v288 = vlaneseq
    %v289 = vshrl.u32 %v288, 7
    %v290 = vsub.s32 0, %v289
    %v291 = vrot.slane %v286, %v290
    %293 = vmatprep.subr.mxu0 0.0
    %294 = vmatpush1.msra.mxu0 %v285
    %295 = vmatprep.subr.mxu0 0.0
    %296 = vmatpush1.msra.mxu0 %v284
    %297 = vmatprep.subr.mxu0 0.0
    %298 = vmatpush1.msra.mxu0 %v283
    %299 = vmatprep.subr.mxu0 0.0
    %300 = vmatpush1.msra.mxu0 %v282
    %301 = vmatprep.subr.mxu0 0.0
    %302 = vmatpush1.msra.mxu0 %v281
    %303 = vmatprep.subr.mxu0 0.0
    %304 = vmatpush1.msra.mxu0 %v280
    %305 = vmatprep.subr.mxu0 0.0
    %306 = vmatpush1.msra.mxu0 %v279
    %307 = vmatprep.subr.mxu0 0.0
    %308 = vmatpush1.msra.mxu0 %v278
    %309 = vmatprep.subr.mxu0 0.0
    %310 = vmatpush1.msra.mxu0 %v277
    %311 = vmatprep.subr.mxu0 0.0
    %312 = vmatpush1.msra.mxu0 %v276
    %313 = vmatprep.subr.mxu0 0.0
    %314 = vmatpush1.msra.mxu0 %v275
    %315 = vmatprep.subr.mxu0 0.0
    %316 = vmatpush1.msra.mxu0 %v274
    %317 = vmatprep.subr.mxu0 0.0
    %318 = vmatpush1.msra.mxu0 %v273
    %319 = vmatprep.subr.mxu0 0.0
    %320 = vmatpush1.msra.mxu0 %v272
    %321 = vmatprep.subr.mxu0 0.0
    %322 = vmatpush1.msra.mxu0 %v271
    %323 = vmatprep.subr.mxu0 0.0
    %324 = vmatpush1.msra.mxu0 %v270
    %325 = vmatprep.subr.mxu0 0.0
    %326 = vmatpush2.msra.mxu0 0.0
    %327 = vmatprep.subr.mxu0 0.0
    %328 = vmatpush2.msra.mxu0 0.0
    %329 = vmatprep.subr.mxu0 0.0
    %330 = vmatpush2.msra.mxu0 0.0
    %331 = vmatprep.subr.mxu0 0.0
    %332 = vmatpush2.msra.mxu0 0.0
    %333 = vmatprep.subr.mxu0 0.0
    %334 = vmatpush2.msra.mxu0 0.0
    %335 = vmatprep.subr.mxu0 0.0
    %336 = vmatpush2.msra.mxu0 0.0
    %337 = vmatprep.subr.mxu0 0.0
    %338 = vmatpush2.msra.mxu0 0.0
    %339 = vmatprep.subr.mxu0 0.0
    %340 = vmatpush2.msra.mxu0 0.0
    %341 = vmatprep.subr.mxu0 0.0
    %342 = vmatpush2.msra.mxu0 0.0
    %343 = vmatprep.subr.mxu0 0.0
    %344 = vmatpush2.msra.mxu0 0.0
    %345 = vmatprep.subr.mxu0 0.0
    %346 = vmatpush2.msra.mxu0 0.0
    %347 = vmatprep.subr.mxu0 0.0
    %348 = vmatpush2.msra.mxu0 0.0
    %349 = vmatprep.subr.mxu0 0.0
    %350 = vmatpush2.msra.mxu0 0.0
    %351 = vmatprep.subr.mxu0 0.0
    %352 = vmatpush2.msra.mxu0 0.0
    %353 = vmatprep.subr.mxu0 0.0
    %354 = vmatpush2.msra.mxu0 0.0
    %355 = vmatprep.subr.mxu0 0.0
    %356 = vmatpush2.msra.mxu0 0.0
    %357 = vmatprep.mubr.f32.mxu0 0.0
    %358 = vmatmul.mubr.f32.gmra.mxu0 %v269
    %v359 = vpop.f32.mrf.mxu0
    %v360 = vadd.f32 %v291, %v359
    %v361 = vpop.f32.mrf.mxu0
    %362 = vdwg.mxu0
    %vm363 = vcmp.gt.f32.partialorder %v360, 0.0
    %v364 = vmul.f32 %v360, 0.01
    %v365 = vsel %vm363, %v360, %v364
    %v366 = vld [vmem:[%s7] sm:$0x1]
    %v368 = vlaneseq
    %v369 = vshrl.u32 %v368, 7
    %v370 = vsub.s32 0, %v369
    %v371 = vrot.slane %v366, %v370
    %v373 = vmul.f32 %v365, %v371
    %374 = vadd.xlane.f32.xlu0 %v373
    %v375 = vpop.xlane.xlu0 %374
    %s376 = sld [smem:[#allocation2]]
    %v377 = vstv %s376
    %v378 = vadd.f32 %v375, %v377
    %vm379 = vcmask 7168
    %380 = vst.msk [vmem:[%s9] sm:$0xff] %vm379, %v378
    // Predicated region
    $region58: #{tpu_custom_call.1} parent=1 // pred_check
      _
    $region59: #{tpu_custom_call.1} parent=1 // pred_check_branch
      %382 = sbr.rel (0) target = $region61
    $region60: #{tpu_custom_call.1} parent=1 // pred_region
      _
    $region61: #{tpu_custom_call.1} parent=1 // pred_fallthru
      _
    // Predicated region
    $region62: #{tpu_custom_call.1} parent=1 // pred_check
      _
    $region63: #{tpu_custom_call.1} parent=1 // pred_check_branch
      %384 = sbr.rel (0) target = $region65
    $region64: #{tpu_custom_call.1} parent=1 // pred_region
      _
    $region65: #{tpu_custom_call.1} parent=1 // pred_fallthru
      _
    %385 = vsyncpa [#allocation4], 1
    %386 = vsyncpa [#allocation6], 1
    %387 = vsyncpa [#allocation9], 1

</llo_original>
